<compile_context>
chip_gen: v5e
topology: v5e:2x2
jax: 0.10.0
libtpu: 0.0.40
codegen_flags: <defaults>
</compile_context>

<pallas_src>
import functools

import numpy as np
import jax
import jax.numpy as jnp
from jax.experimental import pallas as pl
from jax.experimental.pallas import tpu as pltpu


def _round8(n):
    return ((n + 7) // 8) * 8


# ----------------------------------------------------------------------------
# Kernel (feature-major / transposed layout; samples stacked along lanes)
# ----------------------------------------------------------------------------
def _gnn_critic5_kernel(
    x_t_ref,       # (C, Nt)    states^T, Nt = n_samples * n_nodes
    action_ref,    # (1, Nt)    flattened actions (NOT yet +1)
    a_hat_t_ref,   # (Nt, Nt)   block-diagonal normalized adjacency, transposed
    params_ref,    # (R, W)     packed parameter slab (see _pack_params)
    out_ref,       # (1, Bt)    lane-dense Q values, Bt = n_samples * batch
    *,
    C, H, Nt, Bt, act_dim, offs, matmul_dtype,
):
    md = matmul_dtype

    # --- per-call data ---------------------------------------------------------
    x_t = x_t_ref[...]                                        # (C, Nt)
    scale = action_ref[...] + 1.0                             # (1, Nt)

    # --- packed parameters (static, 8-aligned row offsets, lane offset 0) ------
    wg_t = params_ref[offs["wg"]:offs["wg"] + C, 0:C]         # (C, C) = Wg^T
    w1_t = params_ref[offs["w1"]:offs["w1"] + H, 0:C]         # (H, C) = W1^T
    w2_t = params_ref[offs["w2"]:offs["w2"] + H, 0:H]         # (H, H) = W2^T
    w3_r = params_ref[offs["w3"]:offs["w3"] + 1, 0:H]         # (1, H) = W3^T
    bg = params_ref[offs["bg"]:offs["bg"] + C, 0:1]           # (C, 1)
    b1 = params_ref[offs["b1"]:offs["b1"] + H, 0:1]           # (H, 1)
    b2 = params_ref[offs["b2"]:offs["b2"] + H, 0:1]           # (H, 1)
    b3 = params_ref[offs["b3"]:offs["b3"] + 1, 0:1]           # (1, 1)

    # --- GCNConv (transposed): (Wg^T @ X^T) @ A_hat^T + bg, then ReLU ----------
    xw_t = jnp.dot(wg_t.astype(md), x_t.astype(md),
                   preferred_element_type=jnp.float32)                      # (C, Nt)
    g_t = jnp.dot(xw_t.astype(md), a_hat_t_ref[...].astype(md),
                  preferred_element_type=jnp.float32)                       # (C, Nt)
    g_t = jnp.maximum(g_t + bg, 0.0)

    # --- residual + pointwise (action + 1) scaling (per node = per lane) -------
    h_t = (g_t + x_t) * scale                                               # (C, Nt)

    # --- lin1 -> ReLU -> lin2 -> ReLU (feature-major) --------------------------
    h1_t = jnp.maximum(
        jnp.dot(w1_t.astype(md), h_t.astype(md),
                preferred_element_type=jnp.float32) + b1, 0.0)              # (H, Nt)
    h2_t = jnp.maximum(
        jnp.dot(w2_t.astype(md), h1_t.astype(md),
                preferred_element_type=jnp.float32) + b2, 0.0)              # (H, Nt)

    # --- readout: sum over act_dim as a pooling matmul (generated from iota) ---
    # Global node index g = (sample*batch + b)*act_dim + a, so the pooling
    # pattern is identical to the single-sample case with batch -> Bt.
    node_ids = jax.lax.broadcasted_iota(jnp.int32, (Nt, Bt), 0)
    batch_ids = jax.lax.broadcasted_iota(jnp.int32, (Nt, Bt), 1)
    lo = batch_ids * act_dim
    pool_t = jnp.logical_and(node_ids >= lo, node_ids < lo + act_dim)
    pool_t = pool_t.astype(md)                                              # (Nt, Bt)
    pooled_t = jnp.dot(h2_t.astype(md), pool_t,
                       preferred_element_type=jnp.float32)                  # (H, Bt)

    # --- lin3: lane-dense (1, Bt) output ----------------------------------------
    out_ref[...] = (
        jnp.dot(w3_r, pooled_t, preferred_element_type=jnp.float32) + b3)   # (1, Bt)


# ----------------------------------------------------------------------------
# One-time, host-side (numpy) prep — cached in the forward closure
# ----------------------------------------------------------------------------
def _normalized_adjacency(edge_index, n_nodes):
    """Dense symmetric-normalized adjacency with add_remaining_self_loops."""
    ei = np.asarray(edge_index)
    src, dst = ei[0], ei[1]
    adj = np.zeros((n_nodes, n_nodes), np.float32)
    np.add.at(adj, (dst, src), 1.0)     # message flow src -> dst
    missing = (np.diagonal(adj) == 0.0).astype(np.float32)
    adj = adj + np.diag(missing)        # add self-loops only where missing
    deg = adj.sum(axis=1)
    dinv = np.where(deg > 0, 1.0 / np.sqrt(deg), 0.0).astype(np.float32)
    return (dinv[:, None] * adj * dinv[None, :]).astype(np.float32)


def _pack_params(params, C, H):
    """Pack all weights/biases into one f32 slab with static 8-aligned rows."""
    s_wg = 0
    s_w1 = s_wg + _round8(C)
    s_w2 = s_w1 + _round8(H)
    s_w3 = s_w2 + _round8(H)
    s_bg = s_w3 + 8
    s_b1 = s_bg + _round8(C)
    s_b2 = s_b1 + _round8(H)
    s_b3 = s_b2 + _round8(H)
    rows = s_b3 + 1
    width = max(C, H)

    slab = np.zeros((rows, width), np.float32)
    slab[s_wg:s_wg + C, 0:C] = np.asarray(params["wg"], np.float32).T      # Wg^T
    slab[s_w1:s_w1 + H, 0:C] = np.asarray(params["w1"], np.float32).T      # W1^T
    slab[s_w2:s_w2 + H, 0:H] = np.asarray(params["w2"], np.float32).T      # W2^T
    slab[s_w3, 0:H] = np.asarray(params["w3"], np.float32).reshape(-1)     # w3 row
    slab[s_bg:s_bg + C, 0] = np.asarray(params["bg"], np.float32).reshape(-1)
    slab[s_b1:s_b1 + H, 0] = np.asarray(params["b1"], np.float32).reshape(-1)
    slab[s_b2:s_b2 + H, 0] = np.asarray(params["b2"], np.float32).reshape(-1)
    slab[s_b3, 0] = float(np.asarray(params["b3"]).reshape(-1)[0])

    offs = dict(wg=s_wg, w1=s_w1, w2=s_w2, w3=s_w3,
                bg=s_bg, b1=s_b1, b2=s_b2, b3=s_b3)
    return jnp.asarray(slab), offs


# ----------------------------------------------------------------------------
# Builder: caches per-graph / per-parameter prep, returns a jitted forward
# ----------------------------------------------------------------------------
def make_gnn_critic5_forward(params, edge_index, *, n_nodes, act_dim,
                             n_samples, matmul_dtype=jnp.float32):
    C = int(params["wg"].shape[0])
    H = int(params["w1"].shape[1])
    assert n_nodes % act_dim == 0
    B = n_nodes // act_dim
    Nt = n_samples * n_nodes        # total nodes (lane axis)
    Bt = n_samples * B              # total Q values (lane axis of output)

    # --- cached per-graph prep (once) ---------------------------------------
    a_hat = _normalized_adjacency(edge_index, n_nodes)                      # (N, N)
    a_hat_big_t = jnp.asarray(
        np.kron(np.eye(n_samples, dtype=np.float32), a_hat).T)              # (Nt, Nt)

    # --- cached per-parameter-set prep (once per parameter update) ----------
    packed, offs = _pack_params(params, C, H)

    kernel = functools.partial(
        _gnn_critic5_kernel, C=C, H=H, Nt=Nt, Bt=Bt, act_dim=act_dim,
        offs=offs, matmul_dtype=matmul_dtype)

    flops = 2 * (C * C * Nt + C * Nt * Nt + H * C * Nt + H * H * Nt
                 + H * Nt * Bt + H * Bt)
    bytes_accessed = 4 * (C * Nt + Nt + Nt * Nt + int(packed.size) + Bt)

    vmem = pl.BlockSpec(memory_space=pltpu.MemorySpace.VMEM)
    call = pl.pallas_call(
        kernel,
        out_shape=jax.ShapeDtypeStruct((1, Bt), jnp.float32),   # lane-dense
        in_specs=[vmem, vmem, vmem, vmem],
        out_specs=vmem,
        cost_estimate=pl.CostEstimate(flops=int(flops), transcendentals=0,
                                      bytes_accessed=int(bytes_accessed)),
    )

    @jax.jit
    def forward(states, actions):
        """states: (S, N, C) f32; actions: (S, B, act_dim) f32 -> (S, B) Q."""
        assert states.shape == (n_samples, n_nodes, C)
        assert actions.shape == (n_samples, B, act_dim)
        x_t = states.reshape(Nt, C).astype(jnp.float32).T      # (C, Nt)
        a_row = actions.reshape(1, Nt).astype(jnp.float32)     # (1, Nt)
        out = call(x_t, a_row, a_hat_big_t, packed)            # (1, Bt)
        return out.reshape(n_samples, B)

    return forward


# ----------------------------------------------------------------------------
# Pure-JAX reference (per sample, original node-major orientation)
# ----------------------------------------------------------------------------
def _reference_forward(state, action, *, a_hat, params, act_dim):
    n_nodes, in_channels = state.shape
    out = jnp.maximum(a_hat @ (state @ params["wg"]) + params["bg"], 0.0)
    x = out + state
    x = x.reshape(-1, act_dim, in_channels) * (action + 1.0)[..., None]
    x = jnp.maximum(jnp.einsum("bac,ch->bah", x, params["w1"]) + params["b1"], 0.0)
    x = jnp.maximum(jnp.einsum("bah,hk->bak", x, params["w2"]) + params["b2"], 0.0)
    x = x.sum(axis=1)
    return (x @ params["w3"] + params["b3"])[:, 0]


def init_params(key, in_channels, hidden_size):
    """Deterministic synthetic parameters (stored so that y = x @ W + b)."""
    ks = jax.random.split(key, 8)

    def u(k, shape, fan_in):
        bound = 1.0 / jnp.sqrt(fan_in)
        return jax.random.uniform(k, shape, jnp.float32, -bound, bound)

    return {
        "wg": u(ks[0], (in_channels, in_channels), in_channels),
        "bg": u(ks[1], (1, in_channels), in_channels),
        "w1": u(ks[2], (in_channels, hidden_size), in_channels),
        "b1": u(ks[3], (1, hidden_size), in_channels),
        "w2": u(ks[4], (hidden_size, hidden_size), hidden_size),
        "b2": u(ks[5], (1, hidden_size), hidden_size),
        "w3": u(ks[6], (hidden_size, 1), hidden_size),
        "b3": u(ks[7], (1, 1), hidden_size),
    }


if __name__ == "__main__":
    key = jax.random.PRNGKey(0)
    in_channels = 8
    hidden_size = 32
    act_dim = 6
    batch = 2                       # PyG "batch" inside one sample
    n_nodes = batch * act_dim       # 12
    n_samples = 16                  # stacked (state, action) pairs -> 192 lanes

    k_state, k_action, k_params = jax.random.split(key, 3)
    states = jax.random.normal(k_state, (n_samples, n_nodes, in_channels),
                               jnp.float32)
    actions = jax.random.uniform(k_action, (n_samples, batch, act_dim),
                                 jnp.float32)

    # simple ring graph over the nodes (directed edges both ways), no duplicates
    idx = np.arange(n_nodes, dtype=np.int32)
    nxt = (idx + 1) % n_nodes
    edge_index = np.stack(
        [np.concatenate([idx, nxt]), np.concatenate([nxt, idx])], axis=0)

    params = init_params(k_params, in_channels, hidden_size)

    # Build once (caches adjacency + packed params), call per step.
    forward = make_gnn_critic5_forward(
        params, edge_index, n_nodes=n_nodes, act_dim=act_dim,
        n_samples=n_samples)

    q = jax.block_until_ready(forward(states, actions))
    assert q.shape == (n_samples, batch) and q.dtype == jnp.float32

    a_hat = jnp.asarray(_normalized_adjacency(edge_index, n_nodes))
    ref_fn = functools.partial(_reference_forward, a_hat=a_hat, params=params,
                               act_dim=act_dim)
    q_ref = jax.block_until_ready(
        jax.vmap(lambda s, a: ref_fn(s, a))(states, actions))

    np.testing.assert_allclose(np.asarray(q), np.asarray(q_ref),
                               rtol=1e-2, atol=1e-2)
    print("KERNEL_OK")
</pallas_src>

<mosaic_0001>
module attributes {stable_mosaic.version = 11 : i64} {
  func.func @_gnn_critic5_kernel(%arg0: memref<8x192xf32, #tpu.memory_space<vmem>>, %arg1: memref<1x192xf32, #tpu.memory_space<vmem>>, %arg2: memref<192x192xf32, #tpu.memory_space<vmem>>, %arg3: memref<153x32xf32, #tpu.memory_space<vmem>>, %arg4: memref<1x32xf32, #tpu.memory_space<vmem>>) attributes {dimension_semantics = [], scalar_prefetch = 0 : i64, scratch_operands = 0 : i64, tpu.core_type = #tpu.core_type<tc>} {
    %c0 = arith.constant 0 : index
    %c0_0 = arith.constant 0 : index
    %0 = vector.load %arg0[%c0, %c0_0] : memref<8x192xf32, #tpu.memory_space<vmem>>, vector<8x192xf32>
    %c0_1 = arith.constant 0 : index
    %c0_2 = arith.constant 0 : index
    %1 = vector.load %arg1[%c0_1, %c0_2] : memref<1x192xf32, #tpu.memory_space<vmem>>, vector<1x192xf32>
    %cst = arith.constant 1.000000e+00 : f32
    %2 = vector.broadcast %cst : f32 to vector<1x192xf32>
    %3 = arith.addf %1, %2 : vector<1x192xf32>
    %c0_3 = arith.constant 0 : index
    %c0_4 = arith.constant 0 : index
    %4 = vector.load %arg3[%c0_3, %c0_4] : memref<153x32xf32, #tpu.memory_space<vmem>>, vector<8x8xf32>
    %c8 = arith.constant 8 : index
    %c0_5 = arith.constant 0 : index
    %5 = vector.load %arg3[%c8, %c0_5] : memref<153x32xf32, #tpu.memory_space<vmem>>, vector<32x8xf32>
    %c40 = arith.constant 40 : index
    %c0_6 = arith.constant 0 : index
    %6 = vector.load %arg3[%c40, %c0_6] : memref<153x32xf32, #tpu.memory_space<vmem>>, vector<32x32xf32>
    %c72 = arith.constant 72 : index
    %c0_7 = arith.constant 0 : index
    %7 = vector.load %arg3[%c72, %c0_7] : memref<153x32xf32, #tpu.memory_space<vmem>>, vector<1x32xf32>
    %c80 = arith.constant 80 : index
    %c0_8 = arith.constant 0 : index
    %8 = vector.load %arg3[%c80, %c0_8] : memref<153x32xf32, #tpu.memory_space<vmem>>, vector<8x1xf32>
    %c88 = arith.constant 88 : index
    %c0_9 = arith.constant 0 : index
    %9 = vector.load %arg3[%c88, %c0_9] : memref<153x32xf32, #tpu.memory_space<vmem>>, vector<32x1xf32>
    %c120 = arith.constant 120 : index
    %c0_10 = arith.constant 0 : index
    %10 = vector.load %arg3[%c120, %c0_10] : memref<153x32xf32, #tpu.memory_space<vmem>>, vector<32x1xf32>
    %c152 = arith.constant 152 : index
    %c0_11 = arith.constant 0 : index
    %11 = vector.load %arg3[%c152, %c0_11] : memref<153x32xf32, #tpu.memory_space<vmem>>, vector<1x1xf32>
    %cst_12 = arith.constant dense<0.000000e+00> : vector<8x192xf32>
    %12 = tpu.matmul %4, %0, %cst_12 {dimension_numbers = #tpu.dot_dimension_numbers<[1], [0], [0], [1], [0, 0, 1, 1], [], []>} : vector<8x8xf32>, vector<8x192xf32>, vector<8x192xf32> -> vector<8x192xf32>
    %c0_13 = arith.constant 0 : index
    %c0_14 = arith.constant 0 : index
    %13 = vector.load %arg2[%c0_13, %c0_14] : memref<192x192xf32, #tpu.memory_space<vmem>>, vector<192x192xf32>
    %cst_15 = arith.constant dense<0.000000e+00> : vector<8x192xf32>
    %14 = tpu.matmul %12, %13, %cst_15 {dimension_numbers = #tpu.dot_dimension_numbers<[1], [0], [0], [1], [0, 0, 1, 1], [], []>} : vector<8x192xf32>, vector<192x192xf32>, vector<8x192xf32> -> vector<8x192xf32>
    %15 = vector.broadcast %8 : vector<8x1xf32> to vector<8x192xf32>
    %16 = arith.addf %14, %15 : vector<8x192xf32>
    %cst_16 = arith.constant 0.000000e+00 : f32
    %17 = vector.broadcast %cst_16 : f32 to vector<8x192xf32>
    %18 = arith.maximumf %16, %17 : vector<8x192xf32>
    %19 = arith.addf %18, %0 : vector<8x192xf32>
    %20 = vector.broadcast %3 : vector<1x192xf32> to vector<8x192xf32>
    %21 = arith.mulf %19, %20 : vector<8x192xf32>
    %cst_17 = arith.constant dense<0.000000e+00> : vector<32x192xf32>
    %22 = tpu.matmul %5, %21, %cst_17 {dimension_numbers = #tpu.dot_dimension_numbers<[1], [0], [0], [1], [0, 0, 1, 1], [], []>} : vector<32x8xf32>, vector<8x192xf32>, vector<32x192xf32> -> vector<32x192xf32>
    %23 = vector.broadcast %9 : vector<32x1xf32> to vector<32x192xf32>
    %24 = arith.addf %22, %23 : vector<32x192xf32>
    %cst_18 = arith.constant 0.000000e+00 : f32
    %25 = vector.broadcast %cst_18 : f32 to vector<32x192xf32>
    %26 = arith.maximumf %24, %25 : vector<32x192xf32>
    %cst_19 = arith.constant dense<0.000000e+00> : vector<32x192xf32>
    %27 = tpu.matmul %6, %26, %cst_19 {dimension_numbers = #tpu.dot_dimension_numbers<[1], [0], [0], [1], [0, 0, 1, 1], [], []>} : vector<32x32xf32>, vector<32x192xf32>, vector<32x192xf32> -> vector<32x192xf32>
    %28 = vector.broadcast %10 : vector<32x1xf32> to vector<32x192xf32>
    %29 = arith.addf %27, %28 : vector<32x192xf32>
    %cst_20 = arith.constant 0.000000e+00 : f32
    %30 = vector.broadcast %cst_20 : f32 to vector<32x192xf32>
    %31 = arith.maximumf %29, %30 : vector<32x192xf32>
    %32 = tpu.iota {dimensions = array<i32: 0>} : vector<192x32xi32>
    %33 = tpu.iota {dimensions = array<i32: 1>} : vector<192x32xi32>
    %c6_i32 = arith.constant 6 : i32
    %34 = vector.broadcast %c6_i32 : i32 to vector<192x32xi32>
    %35 = arith.muli %33, %34 : vector<192x32xi32>
    %36 = arith.cmpi sge, %32, %35 : vector<192x32xi32>
    %c6_i32_21 = arith.constant 6 : i32
    %37 = vector.broadcast %c6_i32_21 : i32 to vector<192x32xi32>
    %38 = arith.addi %35, %37 : vector<192x32xi32>
    %39 = arith.cmpi slt, %32, %38 : vector<192x32xi32>
    %40 = arith.andi %36, %39 : vector<192x32xi1>
    %41 = arith.extui %40 : vector<192x32xi1> to vector<192x32xi32>
    %42 = arith.sitofp %41 : vector<192x32xi32> to vector<192x32xf32>
    %cst_22 = arith.constant dense<0.000000e+00> : vector<32x32xf32>
    %43 = tpu.matmul %31, %42, %cst_22 {dimension_numbers = #tpu.dot_dimension_numbers<[1], [0], [0], [1], [0, 0, 1, 1], [], []>} : vector<32x192xf32>, vector<192x32xf32>, vector<32x32xf32> -> vector<32x32xf32>
    %cst_23 = arith.constant dense<0.000000e+00> : vector<1x32xf32>
    %44 = tpu.matmul %7, %43, %cst_23 {dimension_numbers = #tpu.dot_dimension_numbers<[1], [0], [0], [1], [0, 0, 1, 1], [], []>} : vector<1x32xf32>, vector<32x32xf32>, vector<1x32xf32> -> vector<1x32xf32>
    %45 = vector.broadcast %11 : vector<1x1xf32> to vector<1x32xf32>
    %46 = arith.addf %44, %45 : vector<1x32xf32>
    %c0_24 = arith.constant 0 : index
    %c0_25 = arith.constant 0 : index
    %47 = vector.load %arg4[%c0_24, %c0_25] : memref<1x32xf32, #tpu.memory_space<vmem>>, vector<1x32xf32>
    tpu.vector_store %arg4[%c0_24, %c0_25], %46 {strides = array<i32>} : memref<1x32xf32, #tpu.memory_space<vmem>>, vector<1x32xf32>,
    return
  }
}

</mosaic_0001>

<llo_original>
// kernel: forward.1
$region0: #{forward.1}
  #allocation0 [shape = 'u32[]', space=smem, size = 0x4, offset = 0x4, fixed_abs, tag = 'smem constant byte address 0x4 - core index']
  #allocation1 [shape = 'u32[72,128]{1,0:T(1,128)}', space=vmem, size = 0x9000, scoped, tag = 'internal scratch']
  %s0 = inlined_call_operand.vmem [shape: f32[8,192], index: 0, kind: input, shape index: {}]
  %s1 = inlined_call_operand.vmem [shape: f32[1,192], index: 1, kind: input, shape index: {}]
  %s2 = inlined_call_operand.vmem [shape: f32[192,192], index: 2, kind: input, shape index: {}]
  %s3 = inlined_call_operand.hbm [shape: f32[153,32], index: 3, kind: input, shape index: {}]
  %s4 = inlined_call_operand.vmem [shape: f32[1,32], index: 4, kind: output, shape index: {}]
  %s5 = sld [smem:[#allocation0]]
  $region30: #{forward.1} parent=0
    _
  %s7 = ssub.s32 1, %s5
  %s8 = scalar_select 0, %s7, %s5
  $region1: #{forward.1} parent=0
    #allocation2 [shape = 'u8[81920]{0}', space=vmem, size = 0x14000, scoped, tag = 'input window, operand 3, single buffered']
    #allocation3 [shape = 's32[1]{0}', space=sflag, size = 0x4, scoped, tag = 'scoped memory for forward.1']
    %9 = vsyncpa [#allocation3], 0
    // Predicated region
    $region2: #{forward.1} parent=1 // pred_check
      _
    $region3: #{forward.1} parent=1 // pred_check_branch
      %11 = sbr.rel (0) target = $region5
    $region4: #{forward.1} parent=1 // pred_region
      _
    $region5: #{forward.1} parent=1 // pred_fallthru
      _
    // Predicated region
    $region6: #{forward.1} parent=1 // pred_check
      _
    $region7: #{forward.1} parent=1 // pred_check_branch
      %13 = sbr.rel (0) target = $region9
    $region8: #{forward.1} parent=1 // pred_region
      _
    $region9: #{forward.1} parent=1 // pred_fallthru
      _
    // Predicated region
    $region10: #{forward.1} parent=1 // pred_check
      _
    $region11: #{forward.1} parent=1 // pred_check_branch
      %15 = sbr.rel (0) target = $region13
    $region12: #{forward.1} parent=1 // pred_region
      _
    $region13: #{forward.1} parent=1 // pred_fallthru
      _
    // Predicated region
    $region14: #{forward.1} parent=1 // pred_check
      _
    $region15: #{forward.1} parent=1 // pred_check_branch
      %17 = sbr.rel (0) target = $region17
    $region16: #{forward.1} parent=1 // pred_region
      %19 = vsyncadd [#allocation3], 0
      %s20 = sshll.u32 %s3, 4
      %s21 = int_to_ptr.hbm [resolvable:$true] %s20
      %s22 = sshll.u32 [#allocation2], 4
      %s23 = int_to_ptr.vmem [resolvable:$true] %s22
      %28 = dma.hbm_to_vmem [thread:$0]  %s21, 2560, %s23, [#allocation3], 128, 128, 8
    $region17: #{forward.1} parent=1 // pred_fallthru
      _
    // Predicated region
    $region18: #{forward.1} parent=1 // pred_check
      _
    $region19: #{forward.1} parent=1 // pred_check_branch
      %30 = sbr.rel (0) target = $region21
    $region20: #{forward.1} parent=1 // pred_region
      %32 = dma.done [#allocation3], 2560
    $region21: #{forward.1} parent=1 // pred_fallthru
      _
    %v33 = vld [vmem:[%s0] sm:$0xff]
    %v34 = vld [vmem:[%s0 + $0x8] sm:$0xff]
    %v35 = vld [vmem:[%s1] sm:$0x3]
    %v36 = vadd.f32 %v35, 1.0
    %v37 = vld [vmem:[#allocation2] sm:$0xff]
    %v38 = vld [vmem:[#allocation2 + $0x8] sm:$0xff]
    %v39 = vld [vmem:[#allocation2 + $0x10] sm:$0xff]
    %v40 = vld [vmem:[#allocation2 + $0x18] sm:$0xff]
    %v41 = vld [vmem:[#allocation2 + $0x20] sm:$0xff]
    %v42 = vld [vmem:[#allocation2 + $0x28] sm:$0xff]
    %v43 = vld [vmem:[#allocation2 + $0x30] sm:$0xff]
    %v44 = vld [vmem:[#allocation2 + $0x38] sm:$0xff]
    %v45 = vld [vmem:[#allocation2 + $0x40] sm:$0xff]
    %v46 = vld [vmem:[#allocation2 + $0x48] sm:$0x1]
    %v47 = vld [vmem:[#allocation2 + $0x50] sm:$0xff]
    %v48 = vld [vmem:[#allocation2 + $0x58] sm:$0xff]
    %v49 = vld [vmem:[#allocation2 + $0x60] sm:$0xff]
    %v50 = vld [vmem:[#allocation2 + $0x68] sm:$0xff]
    %v51 = vld [vmem:[#allocation2 + $0x70] sm:$0xff]
    %v52 = vld [vmem:[#allocation2 + $0x78] sm:$0xff]
    %v53 = vld [vmem:[#allocation2 + $0x80] sm:$0xff]
    %v54 = vld [vmem:[#allocation2 + $0x88] sm:$0xff]
    %v55 = vld [vmem:[#allocation2 + $0x90] sm:$0xff]
    %v56 = vld [vmem:[#allocation2 + $0x98] sm:$0x1]
    %vm57 = vcmask 64512
    %v59 = vsel %vm57, %v37, 0
    %61 = vmatpush.msra.mxu0 0.0
    %62 = vmatpush.msra.mxu0 0.0
    %63 = vmatpush.msra.mxu0 0.0
    %64 = vmatpush.msra.mxu0 0.0
    %65 = vmatpush.msra.mxu0 0.0
    %66 = vmatpush.msra.mxu0 0.0
    %67 = vmatpush.msra.mxu0 0.0
    %68 = vmatpush.msra.mxu0 0.0
    %69 = vmatpush.msra.mxu0 0.0
    %70 = vmatpush.msra.mxu0 0.0
    %71 = vmatpush.msra.mxu0 0.0
    %72 = vmatpush.msra.mxu0 0.0
    %73 = vmatpush.msra.mxu0 0.0
    %74 = vmatpush.msra.mxu0 0.0
    %75 = vmatpush.msra.mxu0 0.0
    %76 = vmatpush.msra.mxu0 %v33
    %77 = vmatmul.f32.gmra.mxu0 %v59
    %v78 = vpop.f32.mrf.mxu0
    %v79 = vadd.f32 0.0, %v78
    %80 = vdwg.mxu0
    %81 = vmatpush.msra.mxu0 0.0
    %82 = vmatpush.msra.mxu0 0.0
    %83 = vmatpush.msra.mxu0 0.0
    %84 = vmatpush.msra.mxu0 0.0
    %85 = vmatpush.msra.mxu0 0.0
    %86 = vmatpush.msra.mxu0 0.0
    %87 = vmatpush.msra.mxu0 0.0
    %88 = vmatpush.msra.mxu0 0.0
    %89 = vmatpush.msra.mxu0 0.0
    %90 = vmatpush.msra.mxu0 0.0
    %91 = vmatpush.msra.mxu0 0.0
    %92 = vmatpush.msra.mxu0 0.0
    %93 = vmatpush.msra.mxu0 0.0
    %94 = vmatpush.msra.mxu0 0.0
    %95 = vmatpush.msra.mxu0 0.0
    %96 = vmatpush.msra.mxu0 %v34
    %97 = vmatmul.f32.gmra.mxu0 %v59
    %v98 = vpop.f32.mrf.mxu0
    %v99 = vadd.f32 0.0, %v98
    %100 = vdwg.mxu0
    %v101 = vld [vmem:[%s2] sm:$0xff]
    %v102 = vld [vmem:[%s2 + $0x8] sm:$0xff]
    %v103 = vld [vmem:[%s2 + $0x10] sm:$0xff]
    %v104 = vld [vmem:[%s2 + $0x18] sm:$0xff]
    %v105 = vld [vmem:[%s2 + $0x20] sm:$0xff]
    %v106 = vld [vmem:[%s2 + $0x28] sm:$0xff]
    %v107 = vld [vmem:[%s2 + $0x30] sm:$0xff]
    %v108 = vld [vmem:[%s2 + $0x38] sm:$0xff]
    %v109 = vld [vmem:[%s2 + $0x40] sm:$0xff]
    %v110 = vld [vmem:[%s2 + $0x48] sm:$0xff]
    %v111 = vld [vmem:[%s2 + $0x50] sm:$0xff]
    %v112 = vld [vmem:[%s2 + $0x58] sm:$0xff]
    %v113 = vld [vmem:[%s2 + $0x60] sm:$0xff]
    %v114 = vld [vmem:[%s2 + $0x68] sm:$0xff]
    %v115 = vld [vmem:[%s2 + $0x70] sm:$0xff]
    %v116 = vld [vmem:[%s2 + $0x78] sm:$0xff]
    %v117 = vld [vmem:[%s2 + $0x80] sm:$0xff]
    %v118 = vld [vmem:[%s2 + $0x88] sm:$0xff]
    %v119 = vld [vmem:[%s2 + $0x90] sm:$0xff]
    %v120 = vld [vmem:[%s2 + $0x98] sm:$0xff]
    %v121 = vld [vmem:[%s2 + $0xa0] sm:$0xff]
    %v122 = vld [vmem:[%s2 + $0xa8] sm:$0xff]
    %v123 = vld [vmem:[%s2 + $0xb0] sm:$0xff]
    %v124 = vld [vmem:[%s2 + $0xb8] sm:$0xff]
    %v125 = vld [vmem:[%s2 + $0xc0] sm:$0xff]
    %v126 = vld [vmem:[%s2 + $0xc8] sm:$0xff]
    %v127 = vld [vmem:[%s2 + $0xd0] sm:$0xff]
    %v128 = vld [vmem:[%s2 + $0xd8] sm:$0xff]
    %v129 = vld [vmem:[%s2 + $0xe0] sm:$0xff]
    %v130 = vld [vmem:[%s2 + $0xe8] sm:$0xff]
    %v131 = vld [vmem:[%s2 + $0xf0] sm:$0xff]
    %v132 = vld [vmem:[%s2 + $0xf8] sm:$0xff]
    %v133 = vld [vmem:[%s2 + $0x100] sm:$0xff]
    %v134 = vld [vmem:[%s2 + $0x108] sm:$0xff]
    %v135 = vld [vmem:[%s2 + $0x110] sm:$0xff]
    %v136 = vld [vmem:[%s2 + $0x118] sm:$0xff]
    %v137 = vld [vmem:[%s2 + $0x120] sm:$0xff]
    %v138 = vld [vmem:[%s2 + $0x128] sm:$0xff]
    %v139 = vld [vmem:[%s2 + $0x130] sm:$0xff]
    %v140 = vld [vmem:[%s2 + $0x138] sm:$0xff]
    %v141 = vld [vmem:[%s2 + $0x140] sm:$0xff]
    %v142 = vld [vmem:[%s2 + $0x148] sm:$0xff]
    %v143 = vld [vmem:[%s2 + $0x150] sm:$0xff]
    %v144 = vld [vmem:[%s2 + $0x158] sm:$0xff]
    %v145 = vld [vmem:[%s2 + $0x160] sm:$0xff]
    %v146 = vld [vmem:[%s2 + $0x168] sm:$0xff]
    %v147 = vld [vmem:[%s2 + $0x170] sm:$0xff]
    %v148 = vld [vmem:[%s2 + $0x178] sm:$0xff]
    %150 = vset.pattern.permute.xlu0 0
    %151 = vperm.xlu0 %150, %v47
    %v152 = vpop.permute.xlu0 %151
    %vm154 = vcmask 523264
    %v156 = vsel %vm154, %v99, 0
    %158 = vmatpush.msra.mxu0 %v131
    %159 = vmatpush.msra.mxu0 %v129
    %160 = vmatpush.msra.mxu0 %v127
    %161 = vmatpush.msra.mxu0 %v125
    %162 = vmatpush.msra.mxu0 %v123
    %163 = vmatpush.msra.mxu0 %v121
    %164 = vmatpush.msra.mxu0 %v119
    %165 = vmatpush.msra.mxu0 %v117
    %166 = vmatpush.msra.mxu0 %v115
    %167 = vmatpush.msra.mxu0 %v113
    %168 = vmatpush.msra.mxu0 %v111
    %169 = vmatpush.msra.mxu0 %v109
    %170 = vmatpush.msra.mxu0 %v107
    %171 = vmatpush.msra.mxu0 %v105
    %172 = vmatpush.msra.mxu0 %v103
    %173 = vmatpush.msra.mxu0 %v101
    %174 = vmatmul.f32.gmra.mxu0 %v79
    %v175 = vpop.f32.mrf.mxu0
    %v176 = vadd.f32 %v152, %v175
    %177 = vdwg.mxu0
    %178 = vmatpush.msra.mxu0 0.0
    %179 = vmatpush.msra.mxu0 0.0
    %180 = vmatpush.msra.mxu0 0.0
    %181 = vmatpush.msra.mxu0 0.0
    %182 = vmatpush.msra.mxu0 0.0
    %183 = vmatpush.msra.mxu0 0.0
    %184 = vmatpush.msra.mxu0 0.0
    %185 = vmatpush.msra.mxu0 0.0
    %186 = vmatpush.msra.mxu0 %v147
    %187 = vmatpush.msra.mxu0 %v145
    %188 = vmatpush.msra.mxu0 %v143
    %189 = vmatpush.msra.mxu0 %v141
    %190 = vmatpush.msra.mxu0 %v139
    %191 = vmatpush.msra.mxu0 %v137
    %192 = vmatpush.msra.mxu0 %v135
    %193 = vmatpush.msra.mxu0 %v133
    %194 = vmatmul.f32.gmra.mxu0 %v156
    %v195 = vpop.f32.mrf.mxu0
    %v196 = vadd.f32 %v176, %v195
    %197 = vdwg.mxu0
    %198 = vmatpush.msra.mxu0 %v132
    %199 = vmatpush.msra.mxu0 %v130
    %200 = vmatpush.msra.mxu0 %v128
    %201 = vmatpush.msra.mxu0 %v126
    %202 = vmatpush.msra.mxu0 %v124
    %203 = vmatpush.msra.mxu0 %v122
    %204 = vmatpush.msra.mxu0 %v120
    %205 = vmatpush.msra.mxu0 %v118
    %206 = vmatpush.msra.mxu0 %v116
    %207 = vmatpush.msra.mxu0 %v114
    %208 = vmatpush.msra.mxu0 %v112
    %209 = vmatpush.msra.mxu0 %v110
    %210 = vmatpush.msra.mxu0 %v108
    %211 = vmatpush.msra.mxu0 %v106
    %212 = vmatpush.msra.mxu0 %v104
    %213 = vmatpush.msra.mxu0 %v102
    %214 = vmatmul.f32.gmra.mxu0 %v79
    %v215 = vpop.f32.mrf.mxu0
    %v216 = vadd.f32 %v152, %v215
    %217 = vdwg.mxu0
    %218 = vmatpush.msra.mxu0 0.0
    %219 = vmatpush.msra.mxu0 0.0
    %220 = vmatpush.msra.mxu0 0.0
    %221 = vmatpush.msra.mxu0 0.0
    %222 = vmatpush.msra.mxu0 0.0
    %223 = vmatpush.msra.mxu0 0.0
    %224 = vmatpush.msra.mxu0 0.0
    %225 = vmatpush.msra.mxu0 0.0
    %226 = vmatpush.msra.mxu0 %v148
    %227 = vmatpush.msra.mxu0 %v146
    %228 = vmatpush.msra.mxu0 %v144
    %229 = vmatpush.msra.mxu0 %v142
    %230 = vmatpush.msra.mxu0 %v140
    %231 = vmatpush.msra.mxu0 %v138
    %232 = vmatpush.msra.mxu0 %v136
    %233 = vmatpush.msra.mxu0 %v134
    %234 = vmatmul.f32.gmra.mxu0 %v156
    %v235 = vpop.f32.mrf.mxu0
    %v236 = vadd.f32 %v216, %v235
    %237 = vdwg.mxu0
    %v238 = vmax.f32 %v196, 0.0
    %v239 = vmax.f32 %v236, 0.0
    %v240 = vadd.f32 %v238, %v33
    %v241 = vadd.f32 %v239, %v34
    %v243 = vperm.slane %v36, 0
    %v244 = vperm.slane %v36, 1
    %v247 = vmul.f32 %v240, %v243
    %v248 = vmul.f32 %v241, %v244
    %250 = vset.pattern.permute.xlu0 0
    %251 = vperm.xlu0 %250, %v48
    %v252 = vpop.permute.xlu0 %251
    %255 = vset.pattern.permute.xlu0 0
    %256 = vperm.xlu0 %255, %v49
    %v257 = vpop.permute.xlu0 %256
    %260 = vset.pattern.permute.xlu0 0
    %261 = vperm.xlu0 %260, %v50
    %v262 = vpop.permute.xlu0 %261
    %265 = vset.pattern.permute.xlu0 0
    %266 = vperm.xlu0 %265, %v51
    %v267 = vpop.permute.xlu0 %266
    %v270 = vsel %vm57, %v38, 0
    %v273 = vsel %vm57, %v39, 0
    %v276 = vsel %vm57, %v40, 0
    %v279 = vsel %vm57, %v41, 0
    %281 = vmatpush.msra.mxu0 0.0
    %282 = vmatpush.msra.mxu0 0.0
    %283 = vmatpush.msra.mxu0 0.0
    %284 = vmatpush.msra.mxu0 0.0
    %285 = vmatpush.msra.mxu0 0.0
    %286 = vmatpush.msra.mxu0 0.0
    %287 = vmatpush.msra.mxu0 0.0
    %288 = vmatpush.msra.mxu0 0.0
    %289 = vmatpush.msra.mxu0 0.0
    %290 = vmatpush.msra.mxu0 0.0
    %291 = vmatpush.msra.mxu0 0.0
    %292 = vmatpush.msra.mxu0 0.0
    %293 = vmatpush.msra.mxu0 0.0
    %294 = vmatpush.msra.mxu0 0.0
    %295 = vmatpush.msra.mxu0 0.0
    %296 = vmatpush.msra.mxu0 %v247
    %297 = vmatmul.f32.gmra.mxu0 %v270
    %v298 = vpop.f32.mrf.mxu0
    %v299 = vadd.f32 %v252, %v298
    %300 = vmatmul.f32.gmra.mxu0 %v273
    %v301 = vpop.f32.mrf.mxu0
    %v302 = vadd.f32 %v257, %v301
    %303 = vmatmul.f32.gmra.mxu0 %v276
    %v304 = vpop.f32.mrf.mxu0
    %v305 = vadd.f32 %v262, %v304
    %306 = vmatmul.f32.gmra.mxu0 %v279
    %v307 = vpop.f32.mrf.mxu0
    %v308 = vadd.f32 %v267, %v307
    %309 = vdwg.mxu0
    %310 = vmatpush.msra.mxu0 0.0
    %311 = vmatpush.msra.mxu0 0.0
    %312 = vmatpush.msra.mxu0 0.0
    %313 = vmatpush.msra.mxu0 0.0
    %314 = vmatpush.msra.mxu0 0.0
    %315 = vmatpush.msra.mxu0 0.0
    %316 = vmatpush.msra.mxu0 0.0
    %317 = vmatpush.msra.mxu0 0.0
    %318 = vmatpush.msra.mxu0 0.0
    %319 = vmatpush.msra.mxu0 0.0
    %320 = vmatpush.msra.mxu0 0.0
    %321 = vmatpush.msra.mxu0 0.0
    %322 = vmatpush.msra.mxu0 0.0
    %323 = vmatpush.msra.mxu0 0.0
    %324 = vmatpush.msra.mxu0 0.0
    %325 = vmatpush.msra.mxu0 %v248
    %326 = vmatmul.f32.gmra.mxu0 %v270
    %v327 = vpop.f32.mrf.mxu0
    %v328 = vadd.f32 %v252, %v327
    %329 = vmatmul.f32.gmra.mxu0 %v273
    %v330 = vpop.f32.mrf.mxu0
    %v331 = vadd.f32 %v257, %v330
    %332 = vmatmul.f32.gmra.mxu0 %v276
    %v333 = vpop.f32.mrf.mxu0
    %v334 = vadd.f32 %v262, %v333
    %335 = vmatmul.f32.gmra.mxu0 %v279
    %v336 = vpop.f32.mrf.mxu0
    %v337 = vadd.f32 %v267, %v336
    %338 = vdwg.mxu0
    %v339 = vmax.f32 %v299, 0.0
    %v340 = vmax.f32 %v328, 0.0
    %v341 = vmax.f32 %v302, 0.0
    %v342 = vmax.f32 %v331, 0.0
    %v343 = vmax.f32 %v305, 0.0
    %v344 = vmax.f32 %v334, 0.0
    %v345 = vmax.f32 %v308, 0.0
    %v346 = vmax.f32 %v337, 0.0
    %348 = vset.pattern.permute.xlu0 0
    %349 = vperm.xlu0 %348, %v52
    %v350 = vpop.permute.xlu0 %349
    %353 = vset.pattern.permute.xlu0 0
    %354 = vperm.xlu0 %353, %v53
    %v355 = vpop.permute.xlu0 %354
    %358 = vset.pattern.permute.xlu0 0
    %359 = vperm.xlu0 %358, %v54
    %v360 = vpop.permute.xlu0 %359
    %363 = vset.pattern.permute.xlu0 0
    %364 = vperm.xlu0 %363, %v55
    %v365 = vpop.permute.xlu0 %364
    %vm367 = vcmask 261120
    %v369 = vsel %vm367, %v42, 0
    %v372 = vsel %vm367, %v43, 0
    %v375 = vsel %vm367, %v44, 0
    %v378 = vsel %vm367, %v45, 0
    %380 = vmatpush.msra.mxu0 0.0
    %381 = vmatpush.msra.mxu0 0.0
    %382 = vmatpush.msra.mxu0 0.0
    %383 = vmatpush.msra.mxu0 0.0
    %384 = vmatpush.msra.mxu0 0.0
    %385 = vmatpush.msra.mxu0 0.0
    %386 = vmatpush.msra.mxu0 0.0
    %387 = vmatpush.msra.mxu0 0.0
    %388 = vmatpush.msra.mxu0 0.0
    %389 = vmatpush.msra.mxu0 0.0
    %390 = vmatpush.msra.mxu0 0.0
    %391 = vmatpush.msra.mxu0 0.0
    %392 = vmatpush.msra.mxu0 %v345
    %393 = vmatpush.msra.mxu0 %v343
    %394 = vmatpush.msra.mxu0 %v341
    %395 = vmatpush.msra.mxu0 %v339
    %396 = vmatmul.f32.gmra.mxu0 %v369
    %v397 = vpop.f32.mrf.mxu0
    %v398 = vadd.f32 %v350, %v397
    %399 = vmatmul.f32.gmra.mxu0 %v372
    %v400 = vpop.f32.mrf.mxu0
    %v401 = vadd.f32 %v355, %v400
    %402 = vmatmul.f32.gmra.mxu0 %v375
    %v403 = vpop.f32.mrf.mxu0
    %v404 = vadd.f32 %v360, %v403
    %405 = vmatmul.f32.gmra.mxu0 %v378
    %v406 = vpop.f32.mrf.mxu0
    %v407 = vadd.f32 %v365, %v406
    %408 = vdwg.mxu0
    %409 = vmatpush.msra.mxu0 0.0
    %410 = vmatpush.msra.mxu0 0.0
    %411 = vmatpush.msra.mxu0 0.0
    %412 = vmatpush.msra.mxu0 0.0
    %413 = vmatpush.msra.mxu0 0.0
    %414 = vmatpush.msra.mxu0 0.0
    %415 = vmatpush.msra.mxu0 0.0
    %416 = vmatpush.msra.mxu0 0.0
    %417 = vmatpush.msra.mxu0 0.0
    %418 = vmatpush.msra.mxu0 0.0
    %419 = vmatpush.msra.mxu0 0.0
    %420 = vmatpush.msra.mxu0 0.0
    %421 = vmatpush.msra.mxu0 %v346
    %422 = vmatpush.msra.mxu0 %v344
    %423 = vmatpush.msra.mxu0 %v342
    %424 = vmatpush.msra.mxu0 %v340
    %425 = vmatmul.f32.gmra.mxu0 %v369
    %v426 = vpop.f32.mrf.mxu0
    %v427 = vadd.f32 %v350, %v426
    %428 = vmatmul.f32.gmra.mxu0 %v372
    %v429 = vpop.f32.mrf.mxu0
    %v430 = vadd.f32 %v355, %v429
    %431 = vmatmul.f32.gmra.mxu0 %v375
    %v432 = vpop.f32.mrf.mxu0
    %v433 = vadd.f32 %v360, %v432
    %434 = vmatmul.f32.gmra.mxu0 %v378
    %v435 = vpop.f32.mrf.mxu0
    %v436 = vadd.f32 %v365, %v435
    %437 = vdwg.mxu0
    %v438 = vmax.f32 %v398, 0.0
    %v439 = vmax.f32 %v427, 0.0
    %v440 = vmax.f32 %v401, 0.0
    %v441 = vmax.f32 %v430, 0.0
    %v442 = vmax.f32 %v404, 0.0
    %v443 = vmax.f32 %v433, 0.0
    %v444 = vmax.f32 %v407, 0.0
    %v445 = vmax.f32 %v436, 0.0
    %v446 = vlaneseq
    %v447 = vshrl.u32 %v446, 7
    %v448 = vadd.s32 %v447, 8
    %v449 = vadd.s32 %v447, 16
    %v450 = vadd.s32 %v447, 24
    %v451 = vadd.s32 %v447, 32
    %v452 = vadd.s32 %v447, 40
    %v453 = vadd.s32 %v447, 48
    %v454 = vadd.s32 %v447, 56
    %v455 = vadd.s32 %v447, 64
    %v456 = vadd.s32 %v447, 72
    %v457 = vadd.s32 %v447, 80
    %v458 = vadd.s32 %v447, 88
    %v459 = vadd.s32 %v447, 96
    %v460 = vadd.s32 %v447, 104
    %v461 = vadd.s32 %v447, 112
    %v462 = vadd.s32 %v447, 120
    %v463 = vadd.s32 %v447, 128
    %v464 = vadd.s32 %v447, 136
    %v465 = vadd.s32 %v447, 144
    %v466 = vadd.s32 %v447, 152
    %v467 = vadd.s32 %v447, 160
    %v468 = vadd.s32 %v447, 168
    %v469 = vadd.s32 %v447, 176
    %v470 = vadd.s32 %v447, 184
    %v471 = vlaneseq
    %v472 = vand.u32 %v471, 127
    %v473 = vmul.u32 %v472, 6
    %vm474 = vcmp.ge.s32.totalorder %v447, %v473
    %vm475 = vcmp.ge.s32.totalorder %v448, %v473
    %vm476 = vcmp.ge.s32.totalorder %v449, %v473
    %vm477 = vcmp.ge.s32.totalorder %v450, %v473
    %vm478 = vcmp.ge.s32.totalorder %v451, %v473
    %vm479 = vcmp.ge.s32.totalorder %v452, %v473
    %vm480 = vcmp.ge.s32.totalorder %v453, %v473
    %vm481 = vcmp.ge.s32.totalorder %v454, %v473
    %vm482 = vcmp.ge.s32.totalorder %v455, %v473
    %vm483 = vcmp.ge.s32.totalorder %v456, %v473
    %vm484 = vcmp.ge.s32.totalorder %v457, %v473
    %vm485 = vcmp.ge.s32.totalorder %v458, %v473
    %vm486 = vcmp.ge.s32.totalorder %v459, %v473
    %vm487 = vcmp.ge.s32.totalorder %v460, %v473
    %vm488 = vcmp.ge.s32.totalorder %v461, %v473
    %vm489 = vcmp.ge.s32.totalorder %v462, %v473
    %vm490 = vcmp.ge.s32.totalorder %v463, %v473
    %vm491 = vcmp.ge.s32.totalorder %v464, %v473
    %vm492 = vcmp.ge.s32.totalorder %v465, %v473
    %vm493 = vcmp.ge.s32.totalorder %v466, %v473
    %vm494 = vcmp.ge.s32.totalorder %v467, %v473
    %vm495 = vcmp.ge.s32.totalorder %v468, %v473
    %vm496 = vcmp.ge.s32.totalorder %v469, %v473
    %vm497 = vcmp.ge.s32.totalorder %v470, %v473
    %v498 = vadd.s32 %v473, 6
    %vm499 = vcmp.lt.s32.totalorder %v447, %v498
    %vm500 = vcmp.lt.s32.totalorder %v448, %v498
    %vm501 = vcmp.lt.s32.totalorder %v449, %v498
    %vm502 = vcmp.lt.s32.totalorder %v450, %v498
    %vm503 = vcmp.lt.s32.totalorder %v451, %v498
    %vm504 = vcmp.lt.s32.totalorder %v452, %v498
    %vm505 = vcmp.lt.s32.totalorder %v453, %v498
    %vm506 = vcmp.lt.s32.totalorder %v454, %v498
    %vm507 = vcmp.lt.s32.totalorder %v455, %v498
    %vm508 = vcmp.lt.s32.totalorder %v456, %v498
    %vm509 = vcmp.lt.s32.totalorder %v457, %v498
    %vm510 = vcmp.lt.s32.totalorder %v458, %v498
    %vm511 = vcmp.lt.s32.totalorder %v459, %v498
    %vm512 = vcmp.lt.s32.totalorder %v460, %v498
    %vm513 = vcmp.lt.s32.totalorder %v461, %v498
    %vm514 = vcmp.lt.s32.totalorder %v462, %v498
    %vm515 = vcmp.lt.s32.totalorder %v463, %v498
    %vm516 = vcmp.lt.s32.totalorder %v464, %v498
    %vm517 = vcmp.lt.s32.totalorder %v465, %v498
    %vm518 = vcmp.lt.s32.totalorder %v466, %v498
    %vm519 = vcmp.lt.s32.totalorder %v467, %v498
    %vm520 = vcmp.lt.s32.totalorder %v468, %v498
    %vm521 = vcmp.lt.s32.totalorder %v469, %v498
    %vm522 = vcmp.lt.s32.totalorder %v470, %v498
    %vm523 = vmand %vm474, %vm499
    %vm524 = vmand %vm475, %vm500
    %vm525 = vmand %vm476, %vm501
    %vm526 = vmand %vm477, %vm502
    %vm527 = vmand %vm478, %vm503
    %vm528 = vmand %vm479, %vm504
    %vm529 = vmand %vm480, %vm505
    %vm530 = vmand %vm481, %vm506
    %vm531 = vmand %vm482, %vm507
    %vm532 = vmand %vm483, %vm508
    %vm533 = vmand %vm484, %vm509
    %vm534 = vmand %vm485, %vm510
    %vm535 = vmand %vm486, %vm511
    %vm536 = vmand %vm487, %vm512
    %vm537 = vmand %vm488, %vm513
    %vm538 = vmand %vm489, %vm514
    %vm539 = vmand %vm490, %vm515
    %vm540 = vmand %vm491, %vm516
    %vm541 = vmand %vm492, %vm517
    %vm542 = vmand %vm493, %vm518
    %vm543 = vmand %vm494, %vm519
    %vm544 = vmand %vm495, %vm520
    %vm545 = vmand %vm496, %vm521
    %vm546 = vmand %vm497, %vm522
    %v547 = vsel %vm523, 1, 0
    %v548 = vsel %vm524, 1, 0
    %v549 = vsel %vm525, 1, 0
    %v550 = vsel %vm526, 1, 0
    %v551 = vsel %vm527, 1, 0
    %v552 = vsel %vm528, 1, 0
    %v553 = vsel %vm529, 1, 0
    %v554 = vsel %vm530, 1, 0
    %v555 = vsel %vm531, 1, 0
    %v556 = vsel %vm532, 1, 0
    %v557 = vsel %vm533, 1, 0
    %v558 = vsel %vm534, 1, 0
    %v559 = vsel %vm535, 1, 0
    %v560 = vsel %vm536, 1, 0
    %v561 = vsel %vm537, 1, 0
    %v562 = vsel %vm538, 1, 0
    %v563 = vsel %vm539, 1, 0
    %v564 = vsel %vm540, 1, 0
    %v565 = vsel %vm541, 1, 0
    %v566 = vsel %vm542, 1, 0
    %v567 = vsel %vm543, 1, 0
    %v568 = vsel %vm544, 1, 0
    %v569 = vsel %vm545, 1, 0
    %v570 = vsel %vm546, 1, 0
    %v571 = vcvt.s32.f32 %v547
    %v572 = vcvt.s32.f32 %v548
    %v573 = vcvt.s32.f32 %v549
    %v574 = vcvt.s32.f32 %v550
    %v575 = vcvt.s32.f32 %v551
    %v576 = vcvt.s32.f32 %v552
    %v577 = vcvt.s32.f32 %v553
    %v578 = vcvt.s32.f32 %v554
    %v579 = vcvt.s32.f32 %v555
    %v580 = vcvt.s32.f32 %v556
    %v581 = vcvt.s32.f32 %v557
    %v582 = vcvt.s32.f32 %v558
    %v583 = vcvt.s32.f32 %v559
    %v584 = vcvt.s32.f32 %v560
    %v585 = vcvt.s32.f32 %v561
    %v586 = vcvt.s32.f32 %v562
    %v587 = vcvt.s32.f32 %v563
    %v588 = vcvt.s32.f32 %v564
    %v589 = vcvt.s32.f32 %v565
    %v590 = vcvt.s32.f32 %v566
    %v591 = vcvt.s32.f32 %v567
    %v592 = vcvt.s32.f32 %v568
    %v593 = vcvt.s32.f32 %v569
    %v594 = vcvt.s32.f32 %v570
    %v596 = vsel %vm154, %v439, 0
    %v599 = vsel %vm154, %v441, 0
    %v602 = vsel %vm154, %v443, 0
    %v605 = vsel %vm154, %v445, 0
    %607 = vmatpush.msra.mxu0 %v586
    %608 = vmatpush.msra.mxu0 %v585
    %609 = vmatpush.msra.mxu0 %v584
    %610 = vmatpush.msra.mxu0 %v583
    %611 = vmatpush.msra.mxu0 %v582
    %612 = vmatpush.msra.mxu0 %v581
    %613 = vmatpush.msra.mxu0 %v580
    %614 = vmatpush.msra.mxu0 %v579
    %615 = vmatpush.msra.mxu0 %v578
    %616 = vmatpush.msra.mxu0 %v577
    %617 = vmatpush.msra.mxu0 %v576
    %618 = vmatpush.msra.mxu0 %v575
    %619 = vmatpush.msra.mxu0 %v574
    %620 = vmatpush.msra.mxu0 %v573
    %621 = vmatpush.msra.mxu0 %v572
    %622 = vmatpush.msra.mxu0 %v571
    %623 = vmatmul.f32.gmra.mxu0 %v438
    %v624 = vpop.f32.mrf.mxu0
    %v625 = vadd.f32 0.0, %v624
    %626 = vmatmul.f32.gmra.mxu0 %v440
    %v627 = vpop.f32.mrf.mxu0
    %v628 = vadd.f32 0.0, %v627
    %629 = vmatmul.f32.gmra.mxu0 %v442
    %v630 = vpop.f32.mrf.mxu0
    %v631 = vadd.f32 0.0, %v630
    %632 = vmatmul.f32.gmra.mxu0 %v444
    %v633 = vpop.f32.mrf.mxu0
    %v634 = vadd.f32 0.0, %v633
    %635 = vdwg.mxu0
    %636 = vmatpush.msra.mxu0 0.0
    %637 = vmatpush.msra.mxu0 0.0
    %638 = vmatpush.msra.mxu0 0.0
    %639 = vmatpush.msra.mxu0 0.0
    %640 = vmatpush.msra.mxu0 0.0
    %641 = vmatpush.msra.mxu0 0.0
    %642 = vmatpush.msra.mxu0 0.0
    %643 = vmatpush.msra.mxu0 0.0
    %644 = vmatpush.msra.mxu0 %v594
    %645 = vmatpush.msra.mxu0 %v593
    %646 = vmatpush.msra.mxu0 %v592
    %647 = vmatpush.msra.mxu0 %v591
    %648 = vmatpush.msra.mxu0 %v590
    %649 = vmatpush.msra.mxu0 %v589
    %650 = vmatpush.msra.mxu0 %v588
    %651 = vmatpush.msra.mxu0 %v587
    %652 = vmatmul.f32.gmra.mxu0 %v596
    %v653 = vpop.f32.mrf.mxu0
    %v654 = vadd.f32 %v625, %v653
    %655 = vmatmul.f32.gmra.mxu0 %v599
    %v656 = vpop.f32.mrf.mxu0
    %v657 = vadd.f32 %v628, %v656
    %658 = vmatmul.f32.gmra.mxu0 %v602
    %v659 = vpop.f32.mrf.mxu0
    %v660 = vadd.f32 %v631, %v659
    %661 = vmatmul.f32.gmra.mxu0 %v605
    %v662 = vpop.f32.mrf.mxu0
    %v663 = vadd.f32 %v634, %v662
    %664 = vdwg.mxu0
    %666 = vset.pattern.permute.xlu0 0
    %667 = vperm.xlu0 %666, %v56
    %v668 = vpop.permute.xlu0 %667
    %v671 = vsel %vm367, %v46, 0
    %673 = vmatpush.msra.mxu0 0.0
    %674 = vmatpush.msra.mxu0 0.0
    %675 = vmatpush.msra.mxu0 0.0
    %676 = vmatpush.msra.mxu0 0.0
    %677 = vmatpush.msra.mxu0 0.0
    %678 = vmatpush.msra.mxu0 0.0
    %679 = vmatpush.msra.mxu0 0.0
    %680 = vmatpush.msra.mxu0 0.0
    %681 = vmatpush.msra.mxu0 0.0
    %682 = vmatpush.msra.mxu0 0.0
    %683 = vmatpush.msra.mxu0 0.0
    %684 = vmatpush.msra.mxu0 0.0
    %685 = vmatpush.msra.mxu0 %v663
    %686 = vmatpush.msra.mxu0 %v660
    %687 = vmatpush.msra.mxu0 %v657
    %688 = vmatpush.msra.mxu0 %v654
    %689 = vmatmul.f32.gmra.mxu0 %v671
    %v690 = vpop.f32.mrf.mxu0
    %v691 = vadd.f32 %v668, %v690
    %692 = vdwg.mxu0
    %vm693 = vcmask 253952
    %694 = vst.msk [vmem:[%s4] sm:$0x1] %vm693, %v691
    // Predicated region
    $region22: #{forward.1} parent=1 // pred_check
      _
    $region23: #{forward.1} parent=1 // pred_check_branch
      %696 = sbr.rel (0) target = $region25
    $region24: #{forward.1} parent=1 // pred_region
      _
    $region25: #{forward.1} parent=1 // pred_fallthru
      _
    // Predicated region
    $region26: #{forward.1} parent=1 // pred_check
      _
    $region27: #{forward.1} parent=1 // pred_check_branch
      %698 = sbr.rel (0) target = $region29
    $region28: #{forward.1} parent=1 // pred_region
      _
    $region29: #{forward.1} parent=1 // pred_fallthru
      _
    %699 = vsyncpa [#allocation3], 1

</llo_original>
